<compile_context>
chip_gen: v5e
topology: v5e:2x2
jax: 0.10.0
libtpu: 0.0.40
codegen_flags: <defaults>
</compile_context>

<pallas_src>
import jax
import jax.numpy as jnp
from jax import lax
from jax.experimental import pallas as pl
from jax.experimental.pallas import tpu as pltpu


def _round_up(n, m):
    return (n + m - 1) // m * m


def _policy_net_kernel(x_ref, w1_ref, b1_ref, w2_ref, b2_ref, w3_ref, b3_ref,
                       o_ref):
    # x_ref: (tb, 24) natural layout. Weights (out, in), biases (out, 1) f32.
    # Cast to the compute dtype (bf16 by default) in-kernel -- no extra HBM pass.
    x = x_ref[...].astype(w1_ref.dtype)

    # fc1: fold the transpose into the matmul:
    #   (64, 24) . (tb, 24)^T -> (64, tb), f32 MXU accumulation.
    h1 = lax.dot_general(w1_ref[...], x,
                         dimension_numbers=(((1,), (1,)), ((), ())),
                         preferred_element_type=jnp.float32)
    h1 = jnp.maximum(h1 + b1_ref[...], 0.0)            # bias + ReLU in f32

    # fc2: (64, 64) @ (64, tb) -> (64, tb)
    h2 = jnp.dot(w2_ref[...], h1.astype(w2_ref.dtype),
                 preferred_element_type=jnp.float32)
    h2 = jnp.maximum(h2 + b2_ref[...], 0.0)

    # fc3 (padded 4 -> 8 output rows): (8, 64) @ (64, tb) -> (8, tb)
    h3 = jnp.dot(w3_ref[...], h2.astype(w3_ref.dtype),
                 preferred_element_type=jnp.float32)
    o_ref[...] = jnp.tanh(h3 + b3_ref[...]).astype(o_ref.dtype)


def prepare_params(params, *, use_bf16=True):
    """One-time prep (do NOT call per forward): cast matmul weights to the
    compute dtype and pad fc3 from 4 -> 8 output rows (full-sublane stores).
    Biases stay f32 (elementwise math is f32 on all chips)."""
    cdt = jnp.bfloat16 if use_bf16 else jnp.float32
    w3 = jnp.pad(params["w3"], ((0, 4), (0, 0)))        # (8, 64)
    b3 = jnp.pad(params["b3"], ((0, 4), (0, 0)))        # (8, 1)
    return {
        "w1": params["w1"].astype(cdt), "b1": params["b1"].astype(jnp.float32),
        "w2": params["w2"].astype(cdt), "b2": params["b2"].astype(jnp.float32),
        "w3": w3.astype(cdt),           "b3": b3.astype(jnp.float32),
    }


def policy_net_forward(x, prepared, *, tb=8192, feature_major_out=False):
    """x: (B, 24) f32 (natural layout). Returns (B, 4) f32, or (4, B) if
    feature_major_out=True (skips the output transpose for downstream code)."""
    B = x.shape[0]

    # Batch tile: multiple of 256 (MXU-native), clamped so tiny batches don't
    # over-pad. Any user-passed tb is rounded up to a legal multiple of 256.
    tb = _round_up(max(256, min(tb, _round_up(B, 256))), 256)
    grid = (pl.cdiv(B, tb),)                            # partial last block OK

    resident = lambda a: pl.BlockSpec(a.shape, lambda i: (0, 0))  # VMEM-resident

    outT = pl.pallas_call(
        _policy_net_kernel,
        out_shape=jax.ShapeDtypeStruct((8, B), jnp.float32),
        grid=grid,
        in_specs=[
            pl.BlockSpec((tb, 24), lambda i: (i, 0)),   # streamed natural-layout x
            resident(prepared["w1"]), resident(prepared["b1"]),
            resident(prepared["w2"]), resident(prepared["b2"]),
            resident(prepared["w3"]), resident(prepared["b3"]),
        ],
        out_specs=pl.BlockSpec((8, tb), lambda i: (0, i)),  # lane-dense, 8 sublanes
        compiler_params=pltpu.CompilerParams(
            dimension_semantics=("parallel",),          # shard batch tiles (v7x)
            vmem_limit_bytes=32 * 1024 * 1024,          # fits v5e/v6e/v7x
        ),
    )(x, prepared["w1"], prepared["b1"], prepared["w2"], prepared["b2"],
      prepared["w3"], prepared["b3"])

    if feature_major_out:
        return outT[:4]                                 # (4, B), no transpose
    return outT[:4].T                                   # (B, 4) module layout


def init_params(key):
    """PyTorch nn.Linear default init U(-1/sqrt(fan_in), 1/sqrt(fan_in)).
    Weights stored (out, in), biases (out, 1)."""
    keys = jax.random.split(key, 6)

    def linear(kw, kb, fan_in, fan_out):
        bound = 1.0 / jnp.sqrt(jnp.float32(fan_in))
        w = jax.random.uniform(kw, (fan_out, fan_in), jnp.float32,
                               minval=-bound, maxval=bound)
        b = jax.random.uniform(kb, (fan_out, 1), jnp.float32,
                               minval=-bound, maxval=bound)
        return w, b

    w1, b1 = linear(keys[0], keys[1], 24, 64)
    w2, b2 = linear(keys[2], keys[3], 64, 64)
    w3, b3 = linear(keys[4], keys[5], 64, 4)
    return {"w1": w1, "b1": b1, "w2": w2, "b2": b2, "w3": w3, "b3": b3}


def _reference_forward(x, params, use_bf16):
    """Pure-JAX reference matching the kernel's cast points exactly."""
    cdt = jnp.bfloat16 if use_bf16 else jnp.float32
    w1, w2, w3 = (params[k].astype(cdt) for k in ("w1", "w2", "w3"))
    h = lax.dot_general(w1, x.astype(cdt), (((1,), (1,)), ((), ())),
                        preferred_element_type=jnp.float32)
    h = jnp.maximum(h + params["b1"], 0.0)
    h = jnp.maximum(jnp.dot(w2, h.astype(cdt),
                            preferred_element_type=jnp.float32) + params["b2"], 0.0)
    h = jnp.dot(w3, h.astype(cdt),
                preferred_element_type=jnp.float32) + params["b3"]
    return jnp.tanh(h).T                                # (B, 4)


if __name__ == "__main__":
    key = jax.random.PRNGKey(0)
    k_x, k_x2, k_p = jax.random.split(key, 3)

    raw = init_params(k_p)
    prep_bf16 = prepare_params(raw, use_bf16=True)      # cast/pad once, reuse
    prep_f32 = prepare_params(raw, use_bf16=False)

    # Small RL-style batch (the module's natural input).
    B = 2
    x = jax.random.normal(k_x, (B, 24), dtype=jnp.float32)

    out_bf = jax.block_until_ready(policy_net_forward(x, prep_bf16))
    assert out_bf.shape == (B, 4), out_bf.shape
    ref_bf = _reference_forward(x, raw, use_bf16=True)
    assert jnp.allclose(out_bf, ref_bf, atol=1e-3, rtol=1e-3), "bf16 mismatch (B=2)"

    # f32 variant: matches the PyTorch f32 module semantics tightly.
    out_f32 = jax.block_until_ready(policy_net_forward(x, prep_f32))
    ref_f32 = _reference_forward(x, raw, use_bf16=False)
    assert jnp.allclose(out_f32, ref_f32, atol=1e-5, rtol=1e-5), "f32 mismatch (B=2)"

    # Ragged multi-tile batch: exercises the cdiv grid + partial last block
    # (no jnp.pad HBM pass; padded lanes are masked off on writeback).
    B2 = 600
    x2 = jax.random.normal(k_x2, (B2, 24), dtype=jnp.float32)

    out2 = jax.block_until_ready(policy_net_forward(x2, prep_f32, tb=256))
    assert out2.shape == (B2, 4), out2.shape
    ref2 = _reference_forward(x2, raw, use_bf16=False)
    assert jnp.allclose(out2, ref2, atol=1e-5, rtol=1e-5), "f32 mismatch (B=600)"

    out2_bf = jax.block_until_ready(policy_net_forward(x2, prep_bf16, tb=256))
    ref2_bf = _reference_forward(x2, raw, use_bf16=True)
    assert jnp.allclose(out2_bf, ref2_bf, atol=1e-3, rtol=1e-3), "bf16 mismatch (B=600)"

    # Feature-major output path (skips the wrapper transpose entirely).
    out_fm = jax.block_until_ready(
        policy_net_forward(x2, prep_bf16, tb=256, feature_major_out=True))
    assert out_fm.shape == (4, B2), out_fm.shape
    assert jnp.allclose(out_fm.T, ref2_bf, atol=1e-3, rtol=1e-3), "feature-major mismatch"

    print("KERNEL_OK")
</pallas_src>

<mosaic_0001>
module attributes {stable_mosaic.version = 11 : i64} {
  func.func @_policy_net_kernel(%arg0: i32, %arg1: memref<256x24xf32, #tpu.memory_space<vmem>>, %arg2: memref<64x24xbf16, #tpu.memory_space<vmem>>, %arg3: memref<64x1xf32, #tpu.memory_space<vmem>>, %arg4: memref<64x64xbf16, #tpu.memory_space<vmem>>, %arg5: memref<64x1xf32, #tpu.memory_space<vmem>>, %arg6: memref<8x64xbf16, #tpu.memory_space<vmem>>, %arg7: memref<8x1xf32, #tpu.memory_space<vmem>>, %arg8: memref<8x256xf32, #tpu.memory_space<vmem>>) attributes {dimension_semantics = [#tpu.dimension_semantics<parallel>], iteration_bounds = array<i64: 1>, scalar_prefetch = 0 : i64, scratch_operands = 0 : i64, tpu.core_type = #tpu.core_type<tc>, window_params = [{transform_indices = @transform_0, window_bounds = array<i64: 256, 24>}, {pipeline_mode = #tpu.pipeline_mode<synchronous>, transform_indices = @transform_1, window_bounds = array<i64: 64, 24>}, {pipeline_mode = #tpu.pipeline_mode<synchronous>, transform_indices = @transform_2, window_bounds = array<i64: 64, 1>}, {pipeline_mode = #tpu.pipeline_mode<synchronous>, transform_indices = @transform_3, window_bounds = array<i64: 64, 64>}, {pipeline_mode = #tpu.pipeline_mode<synchronous>, transform_indices = @transform_4, window_bounds = array<i64: 64, 1>}, {pipeline_mode = #tpu.pipeline_mode<synchronous>, transform_indices = @transform_5, window_bounds = array<i64: 8, 64>}, {pipeline_mode = #tpu.pipeline_mode<synchronous>, transform_indices = @transform_6, window_bounds = array<i64: 8, 1>}, {transform_indices = @transform_7, window_bounds = array<i64: 8, 256>}]} {
    %c0 = arith.constant 0 : index
    %c0_0 = arith.constant 0 : index
    %0 = vector.load %arg1[%c0, %c0_0] : memref<256x24xf32, #tpu.memory_space<vmem>>, vector<256x24xf32>
    %1 = arith.truncf %0 : vector<256x24xf32> to vector<256x24xbf16>
    %c0_1 = arith.constant 0 : index
    %c0_2 = arith.constant 0 : index
    %2 = vector.load %arg2[%c0_1, %c0_2] : memref<64x24xbf16, #tpu.memory_space<vmem>>, vector<64x24xbf16>
    %cst = arith.constant dense<0.000000e+00> : vector<64x256xf32>
    %3 = tpu.matmul %2, %1, %cst {dimension_numbers = #tpu.dot_dimension_numbers<[1], [1], [0], [0], [0, 0, 1, 0], [], []>} : vector<64x24xbf16>, vector<256x24xbf16>, vector<64x256xf32> -> vector<64x256xf32>
    %c0_3 = arith.constant 0 : index
    %c0_4 = arith.constant 0 : index
    %4 = vector.load %arg3[%c0_3, %c0_4] : memref<64x1xf32, #tpu.memory_space<vmem>>, vector<64x1xf32>
    %5 = vector.broadcast %4 : vector<64x1xf32> to vector<64x256xf32>
    %6 = arith.addf %3, %5 : vector<64x256xf32>
    %cst_5 = arith.constant 0.000000e+00 : f32
    %7 = vector.broadcast %cst_5 : f32 to vector<64x256xf32>
    %8 = arith.maximumf %6, %7 : vector<64x256xf32>
    %c0_6 = arith.constant 0 : index
    %c0_7 = arith.constant 0 : index
    %9 = vector.load %arg4[%c0_6, %c0_7] : memref<64x64xbf16, #tpu.memory_space<vmem>>, vector<64x64xbf16>
    %10 = arith.truncf %8 : vector<64x256xf32> to vector<64x256xbf16>
    %cst_8 = arith.constant dense<0.000000e+00> : vector<64x256xf32>
    %11 = tpu.matmul %9, %10, %cst_8 {dimension_numbers = #tpu.dot_dimension_numbers<[1], [0], [0], [1], [0, 0, 1, 1], [], []>} : vector<64x64xbf16>, vector<64x256xbf16>, vector<64x256xf32> -> vector<64x256xf32>
    %c0_9 = arith.constant 0 : index
    %c0_10 = arith.constant 0 : index
    %12 = vector.load %arg5[%c0_9, %c0_10] : memref<64x1xf32, #tpu.memory_space<vmem>>, vector<64x1xf32>
    %13 = vector.broadcast %12 : vector<64x1xf32> to vector<64x256xf32>
    %14 = arith.addf %11, %13 : vector<64x256xf32>
    %cst_11 = arith.constant 0.000000e+00 : f32
    %15 = vector.broadcast %cst_11 : f32 to vector<64x256xf32>
    %16 = arith.maximumf %14, %15 : vector<64x256xf32>
    %c0_12 = arith.constant 0 : index
    %c0_13 = arith.constant 0 : index
    %17 = vector.load %arg6[%c0_12, %c0_13] : memref<8x64xbf16, #tpu.memory_space<vmem>>, vector<8x64xbf16>
    %18 = arith.truncf %16 : vector<64x256xf32> to vector<64x256xbf16>
    %cst_14 = arith.constant dense<0.000000e+00> : vector<8x256xf32>
    %19 = tpu.matmul %17, %18, %cst_14 {dimension_numbers = #tpu.dot_dimension_numbers<[1], [0], [0], [1], [0, 0, 1, 1], [], []>} : vector<8x64xbf16>, vector<64x256xbf16>, vector<8x256xf32> -> vector<8x256xf32>
    %c0_15 = arith.constant 0 : index
    %c0_16 = arith.constant 0 : index
    %20 = vector.load %arg7[%c0_15, %c0_16] : memref<8x1xf32, #tpu.memory_space<vmem>>, vector<8x1xf32>
    %21 = vector.broadcast %20 : vector<8x1xf32> to vector<8x256xf32>
    %22 = arith.addf %19, %21 : vector<8x256xf32>
    %23 = math.tanh %22 : vector<8x256xf32>
    %c0_17 = arith.constant 0 : index
    %c0_18 = arith.constant 0 : index
    %24 = vector.load %arg8[%c0_17, %c0_18] : memref<8x256xf32, #tpu.memory_space<vmem>>, vector<8x256xf32>
    tpu.vector_store %arg8[%c0_17, %c0_18], %23 {strides = array<i32>} : memref<8x256xf32, #tpu.memory_space<vmem>>, vector<8x256xf32>,
    return
  }
  func.func @transform_0(%arg0: i32) -> (i32, i32) {
    %c0_i32 = arith.constant 0 : i32
    %c0_i32_0 = arith.constant 0 : i32
    return %arg0, %c0_i32 : i32, i32
  }
  func.func @transform_1(%arg0: i32) -> (i32, i32) {
    %c0_i32 = arith.constant 0 : i32
    %c0_i32_0 = arith.constant 0 : i32
    %c0_i32_1 = arith.constant 0 : i32
    return %c0_i32, %c0_i32_0 : i32, i32
  }
  func.func @transform_2(%arg0: i32) -> (i32, i32) {
    %c0_i32 = arith.constant 0 : i32
    %c0_i32_0 = arith.constant 0 : i32
    %c0_i32_1 = arith.constant 0 : i32
    return %c0_i32, %c0_i32_0 : i32, i32
  }
  func.func @transform_3(%arg0: i32) -> (i32, i32) {
    %c0_i32 = arith.constant 0 : i32
    %c0_i32_0 = arith.constant 0 : i32
    %c0_i32_1 = arith.constant 0 : i32
    return %c0_i32, %c0_i32_0 : i32, i32
  }
  func.func @transform_4(%arg0: i32) -> (i32, i32) {
    %c0_i32 = arith.constant 0 : i32
    %c0_i32_0 = arith.constant 0 : i32
    %c0_i32_1 = arith.constant 0 : i32
    return %c0_i32, %c0_i32_0 : i32, i32
  }
  func.func @transform_5(%arg0: i32) -> (i32, i32) {
    %c0_i32 = arith.constant 0 : i32
    %c0_i32_0 = arith.constant 0 : i32
    %c0_i32_1 = arith.constant 0 : i32
    return %c0_i32, %c0_i32_0 : i32, i32
  }
  func.func @transform_6(%arg0: i32) -> (i32, i32) {
    %c0_i32 = arith.constant 0 : i32
    %c0_i32_0 = arith.constant 0 : i32
    %c0_i32_1 = arith.constant 0 : i32
    return %c0_i32, %c0_i32_0 : i32, i32
  }
  func.func @transform_7(%arg0: i32) -> (i32, i32) {
    %c0_i32 = arith.constant 0 : i32
    %c0_i32_0 = arith.constant 0 : i32
    return %c0_i32, %arg0 : i32, i32
  }
}

</mosaic_0001>

<llo_original>
// kernel: tpu_custom_call.1
$region0: #{tpu_custom_call.1}
  #allocation0 [shape = 'u32[]', space=smem, size = 0x4, offset = 0x4, fixed_abs, tag = 'smem constant byte address 0x4 - core index']
  #allocation1 [shape = 'u32[72,128]{1,0:T(1,128)}', space=vmem, size = 0x9000, scoped, tag = 'internal scratch']
  %s0 = inlined_call_operand.vmem [shape: f32[2,24], index: 0, kind: input, shape index: {}]
  %s1 = inlined_call_operand.vmem [shape: bf16[64,24], index: 1, kind: input, shape index: {}]
  %s2 = inlined_call_operand.vmem [shape: f32[64,1], index: 2, kind: input, shape index: {}]
  %s3 = inlined_call_operand.vmem [shape: bf16[64,64], index: 3, kind: input, shape index: {}]
  %s4 = inlined_call_operand.vmem [shape: f32[64,1], index: 4, kind: input, shape index: {}]
  %s5 = inlined_call_operand.vmem [shape: bf16[8,64], index: 5, kind: input, shape index: {}]
  %s6 = inlined_call_operand.vmem [shape: f32[8,1], index: 6, kind: input, shape index: {}]
  %s7 = inlined_call_operand.vmem [shape: f32[8,2], index: 7, kind: output, shape index: {}]
  %s8 = sld [smem:[#allocation0]]
  $region72: #{tpu_custom_call.1} parent=0
    _
  %s10 = ssub.s32 1, %s8
  %s11 = scalar_select 0, %s10, %s8
  $region1: #{tpu_custom_call.1} parent=0
    #allocation2 [shape = 'u8[8192]{0}', space=vmem, size = 0x2000, scoped, tag = 'output window, operand 0, single buffered']
    // Predicated region
    $region2: #{tpu_custom_call.1} parent=1 // pred_check
      _
    $region3: #{tpu_custom_call.1} parent=1 // pred_check_branch
      %13 = sbr.rel (0) target = $region5
    $region4: #{tpu_custom_call.1} parent=1 // pred_region
      _
    $region5: #{tpu_custom_call.1} parent=1 // pred_fallthru
      _
    // Predicated region
    $region6: #{tpu_custom_call.1} parent=1 // pred_check
      _
    $region7: #{tpu_custom_call.1} parent=1 // pred_check_branch
      %15 = sbr.rel (0) target = $region9
    $region8: #{tpu_custom_call.1} parent=1 // pred_region
      _
    $region9: #{tpu_custom_call.1} parent=1 // pred_fallthru
      _
    // Predicated region
    $region10: #{tpu_custom_call.1} parent=1 // pred_check
      _
    $region11: #{tpu_custom_call.1} parent=1 // pred_check_branch
      %17 = sbr.rel (0) target = $region13
    $region12: #{tpu_custom_call.1} parent=1 // pred_region
      _
    $region13: #{tpu_custom_call.1} parent=1 // pred_fallthru
      _
    // Predicated region
    $region14: #{tpu_custom_call.1} parent=1 // pred_check
      _
    $region15: #{tpu_custom_call.1} parent=1 // pred_check_branch
      %19 = sbr.rel (0) target = $region17
    $region16: #{tpu_custom_call.1} parent=1 // pred_region
      _
    $region17: #{tpu_custom_call.1} parent=1 // pred_fallthru
      _
    // Predicated region
    $region18: #{tpu_custom_call.1} parent=1 // pred_check
      _
    $region19: #{tpu_custom_call.1} parent=1 // pred_check_branch
      %21 = sbr.rel (0) target = $region21
    $region20: #{tpu_custom_call.1} parent=1 // pred_region
      _
    $region21: #{tpu_custom_call.1} parent=1 // pred_fallthru
      _
    // Predicated region
    $region22: #{tpu_custom_call.1} parent=1 // pred_check
      _
    $region23: #{tpu_custom_call.1} parent=1 // pred_check_branch
      %23 = sbr.rel (0) target = $region25
    $region24: #{tpu_custom_call.1} parent=1 // pred_region
      _
    $region25: #{tpu_custom_call.1} parent=1 // pred_fallthru
      _
    // Predicated region
    $region26: #{tpu_custom_call.1} parent=1 // pred_check
      _
    $region27: #{tpu_custom_call.1} parent=1 // pred_check_branch
      %25 = sbr.rel (0) target = $region29
    $region28: #{tpu_custom_call.1} parent=1 // pred_region
      _
    $region29: #{tpu_custom_call.1} parent=1 // pred_fallthru
      _
    %v27 = vld [vmem:[%s0] sm:$0xff]
    %v28 = vld [vmem:[%s0 + $0x8] sm:$0xff]
    %v29 = vld [vmem:[%s0 + $0x10] sm:$0xff]
    %v30 = vld [vmem:[%s0 + $0x18] sm:$0xff]
    %v31 = vld [vmem:[%s0 + $0x20] sm:$0xff]
    %v32 = vld [vmem:[%s0 + $0x28] sm:$0xff]
    %v33 = vld [vmem:[%s0 + $0x30] sm:$0xff]
    %v34 = vld [vmem:[%s0 + $0x38] sm:$0xff]
    %v35 = vld [vmem:[%s0 + $0x40] sm:$0xff]
    %v36 = vld [vmem:[%s0 + $0x48] sm:$0xff]
    %v37 = vld [vmem:[%s0 + $0x50] sm:$0xff]
    %v38 = vld [vmem:[%s0 + $0x58] sm:$0xff]
    %v39 = vld [vmem:[%s0 + $0x60] sm:$0xff]
    %v40 = vld [vmem:[%s0 + $0x68] sm:$0xff]
    %v41 = vld [vmem:[%s0 + $0x70] sm:$0xff]
    %v42 = vld [vmem:[%s0 + $0x78] sm:$0xff]
    %v43 = vld [vmem:[%s0 + $0x80] sm:$0xff]
    %v44 = vld [vmem:[%s0 + $0x88] sm:$0xff]
    %v45 = vld [vmem:[%s0 + $0x90] sm:$0xff]
    %v46 = vld [vmem:[%s0 + $0x98] sm:$0xff]
    %v47 = vld [vmem:[%s0 + $0xa0] sm:$0xff]
    %v48 = vld [vmem:[%s0 + $0xa8] sm:$0xff]
    %v49 = vld [vmem:[%s0 + $0xb0] sm:$0xff]
    %v50 = vld [vmem:[%s0 + $0xb8] sm:$0xff]
    %v51 = vld [vmem:[%s0 + $0xc0] sm:$0xff]
    %v52 = vld [vmem:[%s0 + $0xc8] sm:$0xff]
    %v53 = vld [vmem:[%s0 + $0xd0] sm:$0xff]
    %v54 = vld [vmem:[%s0 + $0xd8] sm:$0xff]
    %v55 = vld [vmem:[%s0 + $0xe0] sm:$0xff]
    %v56 = vld [vmem:[%s0 + $0xe8] sm:$0xff]
    %v57 = vld [vmem:[%s0 + $0xf0] sm:$0xff]
    %v58 = vld [vmem:[%s0 + $0xf8] sm:$0xff]
    %v59 = vpack.c.bf16 %v28, %v27
    %v60 = vpack.c.bf16 %v30, %v29
    %v61 = vpack.c.bf16 %v32, %v31
    %v62 = vpack.c.bf16 %v34, %v33
    %v63 = vpack.c.bf16 %v36, %v35
    %v64 = vpack.c.bf16 %v38, %v37
    %v65 = vpack.c.bf16 %v40, %v39
    %v66 = vpack.c.bf16 %v42, %v41
    %v67 = vpack.c.bf16 %v44, %v43
    %v68 = vpack.c.bf16 %v46, %v45
    %v69 = vpack.c.bf16 %v48, %v47
    %v70 = vpack.c.bf16 %v50, %v49
    %v71 = vpack.c.bf16 %v52, %v51
    %v72 = vpack.c.bf16 %v54, %v53
    %v73 = vpack.c.bf16 %v56, %v55
    %v74 = vpack.c.bf16 %v58, %v57
    %v75 = vld [vmem:[%s1] sm:$0xf]
    %v76 = vld [vmem:[%s1 + $0x4] sm:$0xf]
    %v77 = vld [vmem:[%s1 + $0x8] sm:$0xf]
    %v78 = vld [vmem:[%s1 + $0xc] sm:$0xf]
    %v79 = vld [vmem:[%s1 + $0x10] sm:$0xf]
    %v80 = vld [vmem:[%s1 + $0x14] sm:$0xf]
    %v81 = vld [vmem:[%s1 + $0x18] sm:$0xf]
    %v82 = vld [vmem:[%s1 + $0x1c] sm:$0xf]
    %v83 = vld [vmem:[%s2] sm:$0xff]
    %v84 = vld [vmem:[%s2 + $0x8] sm:$0xff]
    %v85 = vld [vmem:[%s2 + $0x10] sm:$0xff]
    %v86 = vld [vmem:[%s2 + $0x18] sm:$0xff]
    %v87 = vld [vmem:[%s2 + $0x20] sm:$0xff]
    %v88 = vld [vmem:[%s2 + $0x28] sm:$0xff]
    %v89 = vld [vmem:[%s2 + $0x30] sm:$0xff]
    %v90 = vld [vmem:[%s2 + $0x38] sm:$0xff]
    %92 = vset.pattern.permute.xlu0 0
    %93 = vperm.xlu0 %92, %v83
    %v94 = vpop.permute.xlu0 %93
    %97 = vset.pattern.permute.xlu0 0
    %98 = vperm.xlu0 %97, %v84
    %v99 = vpop.permute.xlu0 %98
    %102 = vset.pattern.permute.xlu0 0
    %103 = vperm.xlu0 %102, %v85
    %v104 = vpop.permute.xlu0 %103
    %107 = vset.pattern.permute.xlu0 0
    %108 = vperm.xlu0 %107, %v86
    %v109 = vpop.permute.xlu0 %108
    %112 = vset.pattern.permute.xlu0 0
    %113 = vperm.xlu0 %112, %v87
    %v114 = vpop.permute.xlu0 %113
    %117 = vset.pattern.permute.xlu0 0
    %118 = vperm.xlu0 %117, %v88
    %v119 = vpop.permute.xlu0 %118
    %122 = vset.pattern.permute.xlu0 0
    %123 = vperm.xlu0 %122, %v89
    %v124 = vpop.permute.xlu0 %123
    %127 = vset.pattern.permute.xlu0 0
    %128 = vperm.xlu0 %127, %v90
    %v129 = vpop.permute.xlu0 %128
    %v139 = vunpack.c.l.b16 %v75
    %v140 = vunpack.c.l.b16 %v76
    %v141 = vunpack.c.l.b16 %v77
    %v142 = vunpack.c.l.b16 %v78
    %v143 = vunpack.c.l.b16 %v79
    %v144 = vunpack.c.l.b16 %v80
    %v145 = vunpack.c.l.b16 %v81
    %v146 = vunpack.c.l.b16 %v82
    %v147 = vpack.c.b16 %v140, %v139
    %v148 = vpack.c.b16 %v142, %v141
    %v149 = vpack.c.b16 %v144, %v143
    %v150 = vpack.c.b16 %v146, %v145
    %vm151 = vcmask 195584
    %v153 = vsel %vm151, %v147, 0
    %v156 = vsel %vm151, %v148, 0
    %v159 = vsel %vm151, %v149, 0
    %v162 = vsel %vm151, %v150, 0
    %v165 = vsel %vm151, %v59, 0
    %v168 = vsel %vm151, %v60, 0
    %v171 = vsel %vm151, %v61, 0
    %v174 = vsel %vm151, %v62, 0
    %v177 = vsel %vm151, %v63, 0
    %v180 = vsel %vm151, %v64, 0
    %v183 = vsel %vm151, %v65, 0
    %v186 = vsel %vm151, %v66, 0
    %v189 = vsel %vm151, %v67, 0
    %v192 = vsel %vm151, %v68, 0
    %v195 = vsel %vm151, %v69, 0
    %v198 = vsel %vm151, %v70, 0
    %v201 = vsel %vm151, %v71, 0
    %v204 = vsel %vm151, %v72, 0
    %v207 = vsel %vm151, %v73, 0
    %v210 = vsel %vm151, %v74, 0
    %212 = vmatpush.bf16.xpose.msra.mxu0 %v186
    %213 = vmatpush.bf16.xpose.msra.mxu0 %v183
    %214 = vmatpush.bf16.xpose.msra.mxu0 %v180
    %215 = vmatpush.bf16.xpose.msra.mxu0 %v177
    %216 = vmatpush.bf16.xpose.msra.mxu0 %v174
    %217 = vmatpush.bf16.xpose.msra.mxu0 %v171
    %218 = vmatpush.bf16.xpose.msra.mxu0 %v168
    %219 = vmatpush.bf16.xpose.msra.mxu0 %v165
    %220 = vmatmul.bf16.gmra.mxu0 %v153
    %v221 = vpop.f32.mrf.mxu0
    %v222 = vadd.f32 %v94, %v221
    %v223 = vpop.f32.mrf.mxu0
    %v224 = vadd.f32 %v99, %v223
    %225 = vmatmul.bf16.gmra.mxu0 %v156
    %v226 = vpop.f32.mrf.mxu0
    %v227 = vadd.f32 %v104, %v226
    %v228 = vpop.f32.mrf.mxu0
    %v229 = vadd.f32 %v109, %v228
    %230 = vmatmul.bf16.gmra.mxu0 %v159
    %v231 = vpop.f32.mrf.mxu0
    %v232 = vadd.f32 %v114, %v231
    %v233 = vpop.f32.mrf.mxu0
    %v234 = vadd.f32 %v119, %v233
    %235 = vmatmul.bf16.gmra.mxu0 %v162
    %v236 = vpop.f32.mrf.mxu0
    %v237 = vadd.f32 %v124, %v236
    %v238 = vpop.f32.mrf.mxu0
    %v239 = vadd.f32 %v129, %v238
    %240 = vdwg.mxu0
    %241 = vmatpush.bf16.xpose.msra.mxu0 %v210
    %242 = vmatpush.bf16.xpose.msra.mxu0 %v207
    %243 = vmatpush.bf16.xpose.msra.mxu0 %v204
    %244 = vmatpush.bf16.xpose.msra.mxu0 %v201
    %245 = vmatpush.bf16.xpose.msra.mxu0 %v198
    %246 = vmatpush.bf16.xpose.msra.mxu0 %v195
    %247 = vmatpush.bf16.xpose.msra.mxu0 %v192
    %248 = vmatpush.bf16.xpose.msra.mxu0 %v189
    %249 = vmatmul.bf16.gmra.mxu0 %v153
    %v250 = vpop.f32.mrf.mxu0
    %v251 = vadd.f32 %v94, %v250
    %v252 = vpop.f32.mrf.mxu0
    %v253 = vadd.f32 %v99, %v252
    %254 = vmatmul.bf16.gmra.mxu0 %v156
    %v255 = vpop.f32.mrf.mxu0
    %v256 = vadd.f32 %v104, %v255
    %v257 = vpop.f32.mrf.mxu0
    %v258 = vadd.f32 %v109, %v257
    %259 = vmatmul.bf16.gmra.mxu0 %v159
    %v260 = vpop.f32.mrf.mxu0
    %v261 = vadd.f32 %v114, %v260
    %v262 = vpop.f32.mrf.mxu0
    %v263 = vadd.f32 %v119, %v262
    %264 = vmatmul.bf16.gmra.mxu0 %v162
    %v265 = vpop.f32.mrf.mxu0
    %v266 = vadd.f32 %v124, %v265
    %v267 = vpop.f32.mrf.mxu0
    %v268 = vadd.f32 %v129, %v267
    %269 = vdwg.mxu0
    %v270 = vmax.f32 %v222, 0.0
    %v271 = vmax.f32 %v251, 0.0
    %v272 = vmax.f32 %v224, 0.0
    %v273 = vmax.f32 %v253, 0.0
    %v274 = vmax.f32 %v227, 0.0
    %v275 = vmax.f32 %v256, 0.0
    %v276 = vmax.f32 %v229, 0.0
    %v277 = vmax.f32 %v258, 0.0
    %v278 = vmax.f32 %v232, 0.0
    %v279 = vmax.f32 %v261, 0.0
    %v280 = vmax.f32 %v234, 0.0
    %v281 = vmax.f32 %v263, 0.0
    %v282 = vmax.f32 %v237, 0.0
    %v283 = vmax.f32 %v266, 0.0
    %v284 = vmax.f32 %v239, 0.0
    %v285 = vmax.f32 %v268, 0.0
    %v286 = vld [vmem:[%s3] sm:$0xf]
    %v287 = vld [vmem:[%s3 + $0x4] sm:$0xf]
    %v288 = vld [vmem:[%s3 + $0x8] sm:$0xf]
    %v289 = vld [vmem:[%s3 + $0xc] sm:$0xf]
    %v290 = vld [vmem:[%s3 + $0x10] sm:$0xf]
    %v291 = vld [vmem:[%s3 + $0x14] sm:$0xf]
    %v292 = vld [vmem:[%s3 + $0x18] sm:$0xf]
    %v293 = vld [vmem:[%s3 + $0x1c] sm:$0xf]
    %v294 = vpack.c.bf16 %v272, %v270
    %v295 = vpack.c.bf16 %v273, %v271
    %v296 = vpack.c.bf16 %v276, %v274
    %v297 = vpack.c.bf16 %v277, %v275
    %v298 = vpack.c.bf16 %v280, %v278
    %v299 = vpack.c.bf16 %v281, %v279
    %v300 = vpack.c.bf16 %v284, %v282
    %v301 = vpack.c.bf16 %v285, %v283
    %v302 = vld [vmem:[%s4] sm:$0xff]
    %v303 = vld [vmem:[%s4 + $0x8] sm:$0xff]
    %v304 = vld [vmem:[%s4 + $0x10] sm:$0xff]
    %v305 = vld [vmem:[%s4 + $0x18] sm:$0xff]
    %v306 = vld [vmem:[%s4 + $0x20] sm:$0xff]
    %v307 = vld [vmem:[%s4 + $0x28] sm:$0xff]
    %v308 = vld [vmem:[%s4 + $0x30] sm:$0xff]
    %v309 = vld [vmem:[%s4 + $0x38] sm:$0xff]
    %311 = vset.pattern.permute.xlu0 0
    %312 = vperm.xlu0 %311, %v302
    %v313 = vpop.permute.xlu0 %312
    %316 = vset.pattern.permute.xlu0 0
    %317 = vperm.xlu0 %316, %v303
    %v318 = vpop.permute.xlu0 %317
    %321 = vset.pattern.permute.xlu0 0
    %322 = vperm.xlu0 %321, %v304
    %v323 = vpop.permute.xlu0 %322
    %326 = vset.pattern.permute.xlu0 0
    %327 = vperm.xlu0 %326, %v305
    %v328 = vpop.permute.xlu0 %327
    %331 = vset.pattern.permute.xlu0 0
    %332 = vperm.xlu0 %331, %v306
    %v333 = vpop.permute.xlu0 %332
    %336 = vset.pattern.permute.xlu0 0
    %337 = vperm.xlu0 %336, %v307
    %v338 = vpop.permute.xlu0 %337
    %341 = vset.pattern.permute.xlu0 0
    %342 = vperm.xlu0 %341, %v308
    %v343 = vpop.permute.xlu0 %342
    %346 = vset.pattern.permute.xlu0 0
    %347 = vperm.xlu0 %346, %v309
    %v348 = vpop.permute.xlu0 %347
    %v358 = vunpack.c.l.b16 %v286
    %v359 = vunpack.c.l.b16 %v287
    %v360 = vunpack.c.l.b16 %v288
    %v361 = vunpack.c.l.b16 %v289
    %v362 = vunpack.c.l.b16 %v290
    %v363 = vunpack.c.l.b16 %v291
    %v364 = vunpack.c.l.b16 %v292
    %v365 = vunpack.c.l.b16 %v293
    %v366 = vpack.c.b16 %v359, %v358
    %v367 = vpack.c.b16 %v361, %v360
    %v368 = vpack.c.b16 %v363, %v362
    %v369 = vpack.c.b16 %v365, %v364
    %vm370 = vcmask 523264
    %v372 = vsel %vm370, %v366, 0
    %v375 = vsel %vm370, %v367, 0
    %v378 = vsel %vm370, %v368, 0
    %v381 = vsel %vm370, %v369, 0
    %383 = vmatpush.bf16.msra.mxu0 0
    %384 = vmatpush.bf16.msra.mxu0 0
    %385 = vmatpush.bf16.msra.mxu0 0
    %386 = vmatpush.bf16.msra.mxu0 0
    %387 = vmatpush.bf16.msra.mxu0 %v300
    %388 = vmatpush.bf16.msra.mxu0 %v298
    %389 = vmatpush.bf16.msra.mxu0 %v296
    %390 = vmatpush.bf16.msra.mxu0 %v294
    %391 = vmatmul.bf16.gmra.mxu0 %v372
    %v392 = vpop.f32.mrf.mxu0
    %v393 = vadd.f32 %v313, %v392
    %v394 = vpop.f32.mrf.mxu0
    %v395 = vadd.f32 %v318, %v394
    %396 = vmatmul.bf16.gmra.mxu0 %v375
    %v397 = vpop.f32.mrf.mxu0
    %v398 = vadd.f32 %v323, %v397
    %v399 = vpop.f32.mrf.mxu0
    %v400 = vadd.f32 %v328, %v399
    %401 = vmatmul.bf16.gmra.mxu0 %v378
    %v402 = vpop.f32.mrf.mxu0
    %v403 = vadd.f32 %v333, %v402
    %v404 = vpop.f32.mrf.mxu0
    %v405 = vadd.f32 %v338, %v404
    %406 = vmatmul.bf16.gmra.mxu0 %v381
    %v407 = vpop.f32.mrf.mxu0
    %v408 = vadd.f32 %v343, %v407
    %v409 = vpop.f32.mrf.mxu0
    %v410 = vadd.f32 %v348, %v409
    %411 = vdwg.mxu0
    %412 = vmatpush.bf16.msra.mxu0 0
    %413 = vmatpush.bf16.msra.mxu0 0
    %414 = vmatpush.bf16.msra.mxu0 0
    %415 = vmatpush.bf16.msra.mxu0 0
    %416 = vmatpush.bf16.msra.mxu0 %v301
    %417 = vmatpush.bf16.msra.mxu0 %v299
    %418 = vmatpush.bf16.msra.mxu0 %v297
    %419 = vmatpush.bf16.msra.mxu0 %v295
    %420 = vmatmul.bf16.gmra.mxu0 %v372
    %v421 = vpop.f32.mrf.mxu0
    %v422 = vadd.f32 %v313, %v421
    %v423 = vpop.f32.mrf.mxu0
    %v424 = vadd.f32 %v318, %v423
    %425 = vmatmul.bf16.gmra.mxu0 %v375
    %v426 = vpop.f32.mrf.mxu0
    %v427 = vadd.f32 %v323, %v426
    %v428 = vpop.f32.mrf.mxu0
    %v429 = vadd.f32 %v328, %v428
    %430 = vmatmul.bf16.gmra.mxu0 %v378
    %v431 = vpop.f32.mrf.mxu0
    %v432 = vadd.f32 %v333, %v431
    %v433 = vpop.f32.mrf.mxu0
    %v434 = vadd.f32 %v338, %v433
    %435 = vmatmul.bf16.gmra.mxu0 %v381
    %v436 = vpop.f32.mrf.mxu0
    %v437 = vadd.f32 %v343, %v436
    %v438 = vpop.f32.mrf.mxu0
    %v439 = vadd.f32 %v348, %v438
    %440 = vdwg.mxu0
    %v441 = vmax.f32 %v393, 0.0
    %v442 = vmax.f32 %v422, 0.0
    %v443 = vmax.f32 %v395, 0.0
    %v444 = vmax.f32 %v424, 0.0
    %v445 = vmax.f32 %v398, 0.0
    %v446 = vmax.f32 %v427, 0.0
    %v447 = vmax.f32 %v400, 0.0
    %v448 = vmax.f32 %v429, 0.0
    %v449 = vmax.f32 %v403, 0.0
    %v450 = vmax.f32 %v432, 0.0
    %v451 = vmax.f32 %v405, 0.0
    %v452 = vmax.f32 %v434, 0.0
    %v453 = vmax.f32 %v408, 0.0
    %v454 = vmax.f32 %v437, 0.0
    %v455 = vmax.f32 %v410, 0.0
    %v456 = vmax.f32 %v439, 0.0
    %v457 = vld [vmem:[%s5] sm:$0xf]
    %v458 = vpack.c.bf16 %v443, %v441
    %v459 = vpack.c.bf16 %v444, %v442
    %v460 = vpack.c.bf16 %v447, %v445
    %v461 = vpack.c.bf16 %v448, %v446
    %v462 = vpack.c.bf16 %v451, %v449
    %v463 = vpack.c.bf16 %v452, %v450
    %v464 = vpack.c.bf16 %v455, %v453
    %v465 = vpack.c.bf16 %v456, %v454
    %v466 = vld [vmem:[%s6] sm:$0xff]
    %468 = vset.pattern.permute.xlu0 0
    %469 = vperm.xlu0 %468, %v466
    %v470 = vpop.permute.xlu0 %469
    %v473 = vsel %vm370, %v457, 0
    %475 = vmatpush.bf16.msra.mxu0 0
    %476 = vmatpush.bf16.msra.mxu0 0
    %477 = vmatpush.bf16.msra.mxu0 0
    %478 = vmatpush.bf16.msra.mxu0 0
    %479 = vmatpush.bf16.msra.mxu0 %v464
    %480 = vmatpush.bf16.msra.mxu0 %v462
    %481 = vmatpush.bf16.msra.mxu0 %v460
    %482 = vmatpush.bf16.msra.mxu0 %v458
    %483 = vmatmul.bf16.gmra.mxu0 %v473
    %v484 = vpop.f32.mrf.mxu0
    %v485 = vadd.f32 %v470, %v484
    %v486 = vpop.f32.mrf.mxu0
    %487 = vdwg.mxu0
    %488 = vmatpush.bf16.msra.mxu0 0
    %489 = vmatpush.bf16.msra.mxu0 0
    %490 = vmatpush.bf16.msra.mxu0 0
    %491 = vmatpush.bf16.msra.mxu0 0
    %492 = vmatpush.bf16.msra.mxu0 %v465
    %493 = vmatpush.bf16.msra.mxu0 %v463
    %494 = vmatpush.bf16.msra.mxu0 %v461
    %495 = vmatpush.bf16.msra.mxu0 %v459
    %496 = vmatmul.bf16.gmra.mxu0 %v473
    %v497 = vpop.f32.mrf.mxu0
    %v498 = vadd.f32 %v470, %v497
    %v499 = vpop.f32.mrf.mxu0
    %500 = vdwg.mxu0
    %v501 = vtanh.pop %v485
    %v502 = vtanh.pop %v498
    %503 = vst [vmem:[#allocation2] sm:$0xff] %v501
    %504 = vst [vmem:[#allocation2 + $0x8] sm:$0xff] %v502
    // Predicated region
    $region30: #{tpu_custom_call.1} parent=1 // pred_check
      _
    $region31: #{tpu_custom_call.1} parent=1 // pred_check_branch
      %506 = sbr.rel (0) target = $region33
    $region32: #{tpu_custom_call.1} parent=1 // pred_region
      // Predicated region
      $region34: #{tpu_custom_call.1} parent=32 // pred_check
        _
      $region35: #{tpu_custom_call.1} parent=32 // pred_check_branch
        %508 = sbr.rel (0) target = $region37
      $region36: #{tpu_custom_call.1} parent=32 // pred_region
        // Predicated region
        $region38: #{tpu_custom_call.1} parent=36 // pred_check
          _
        $region39: #{tpu_custom_call.1} parent=36 // pred_check_branch
          %510 = sbr.rel (0) target = $region41
        $region40: #{tpu_custom_call.1} parent=36 // pred_region
          // Predicated region
          $region53: #{tpu_custom_call.1} parent=40 // pred_check
            _
          $region54: #{tpu_custom_call.1} parent=40 // pred_check_branch
            %526 = sbr.rel (0) target = $region56
          $region55: #{tpu_custom_call.1} parent=40 // pred_region
            loop: start=0, step=1, limit=1
            $region57: #{tpu_custom_call.1} parent=55 // loop_pre_header
              _
            $region58: #{tpu_custom_call.1} parent=55 // loop_header
              %s528 = sphi 0, %s532
              %p529 = scmp.ge.s32.totalorder %s528, 1
              %s533 = sphi [#allocation2], [#allocation2]
              %s534 = sphi %s7, %s7
            $region59: #{tpu_custom_call.1} parent=55 // loop_header_branch
              %531 = sbr.rel (%p529) target = $region63
            $region60: #{tpu_custom_call.1} parent=55 // loop_body
              %v535 = vld [vmem:[%s533] sm:$0xff]
              %536 = vst [vmem:[%s534] sm:$0xff] %v535
            $region61: #{tpu_custom_call.1} parent=55 // loop_footer
              %s532 = sadd.s32 1, %s528
            $region62: #{tpu_custom_call.1} parent=55 // loop_footer_branch
              %527 = sbr.rel target = $region58
            $region63: #{tpu_custom_call.1} parent=55 // loop_exit
              _
          $region56: #{tpu_custom_call.1} parent=40 // pred_fallthru
            _
          // Predicated region
          $region64: #{tpu_custom_call.1} parent=40 // pred_check
            _
          $region65: #{tpu_custom_call.1} parent=40 // pred_check_branch
            %538 = sbr.rel target = $region67
          $region66: #{tpu_custom_call.1} parent=40 // pred_region
            _
          $region67: #{tpu_custom_call.1} parent=40 // pred_fallthru
            _
        $region41: #{tpu_custom_call.1} parent=36 // pred_fallthru
          _
        // Predicated region
        $region42: #{tpu_custom_call.1} parent=36 // pred_check
          _
        $region43: #{tpu_custom_call.1} parent=36 // pred_check_branch
          %512 = sbr.rel target = $region45
        $region44: #{tpu_custom_call.1} parent=36 // pred_region
          %s514 = ssub.s32 256, 1
          loop: start=0, step=1, limit=1
          $region46: #{tpu_custom_call.1} parent=44 // loop_pre_header
            _
          $region47: #{tpu_custom_call.1} parent=44 // loop_header
            %s516 = sphi 0, %s520
            %p517 = scmp.ge.s32.totalorder %s516, 1
            %s521 = sphi [#allocation2], [#allocation2]
            %s522 = sphi %s7, %s7
          $region48: #{tpu_custom_call.1} parent=44 // loop_header_branch
            %519 = sbr.rel (%p517) target = $region52
          $region49: #{tpu_custom_call.1} parent=44 // loop_body
            %v523 = vld [vmem:[%s521] sm:%s514]
            %524 = vst [vmem:[%s522] sm:%s514] %v523
          $region50: #{tpu_custom_call.1} parent=44 // loop_footer
            %s520 = sadd.s32 1, %s516
          $region51: #{tpu_custom_call.1} parent=44 // loop_footer_branch
            %515 = sbr.rel target = $region47
          $region52: #{tpu_custom_call.1} parent=44 // loop_exit
            _
        $region45: #{tpu_custom_call.1} parent=36 // pred_fallthru
          _
      $region37: #{tpu_custom_call.1} parent=32 // pred_fallthru
        _
      %539 = vnop
    $region33: #{tpu_custom_call.1} parent=1 // pred_fallthru
      _
    // Predicated region
    $region68: #{tpu_custom_call.1} parent=1 // pred_check
      _
    $region69: #{tpu_custom_call.1} parent=1 // pred_check_branch
      %541 = sbr.rel (0) target = $region71
    $region70: #{tpu_custom_call.1} parent=1 // pred_region
      _
    $region71: #{tpu_custom_call.1} parent=1 // pred_fallthru
      _

</llo_original>
